<compile_context>
chip_gen: v6e
topology: v6e:2x2x1
jax: 0.10.0
libtpu: 0.0.40
codegen_flags: <defaults>
</compile_context>

<pallas_src>
import functools

import jax
import jax.numpy as jnp
from jax.experimental import pallas as pl
from jax.experimental.pallas import tpu as pltpu


# --------------------------------------------------------------------------
# DDPM schedules (pure JAX glue; matches ddpm_schedules in p1_train.py)
# --------------------------------------------------------------------------
def ddpm_schedules(beta1, beta2, T):
    assert beta1 < beta2 < 1.0
    beta_t = (beta2 - beta1) * jnp.arange(0, T + 1, dtype=jnp.float32) / T + beta1
    sqrt_beta_t = jnp.sqrt(beta_t)
    alpha_t = 1.0 - beta_t
    log_alpha_t = jnp.log(alpha_t)
    alphabar_t = jnp.exp(jnp.cumsum(log_alpha_t, axis=0))
    sqrtab = jnp.sqrt(alphabar_t)
    oneover_sqrta = 1.0 / jnp.sqrt(alpha_t)
    sqrtmab = jnp.sqrt(1.0 - alphabar_t)
    mab_over_sqrtmab_inv = (1.0 - alpha_t) / sqrtmab
    return {
        "alpha_t": alpha_t,
        "oneover_sqrta": oneover_sqrta,
        "sqrt_beta_t": sqrt_beta_t,
        "alphabar_t": alphabar_t,
        "sqrtab": sqrtab,
        "sqrtmab": sqrtmab,
        "mab_over_sqrtmab": mab_over_sqrtmab_inv,
    }


# --------------------------------------------------------------------------
# Pallas kernel: single-shot diffusion mix + synthetic eps-predictor + MSE
# --------------------------------------------------------------------------
def ddpm_loss_kernel(scal_ref, x_ref, eps_ref, w_ref, bias_ref, out_ref, *, B, C):
    """Single invocation over the whole batch (no grid).

    scal_ref : SMEM (3, B)     rows = [sqrtab[t_b], sqrtmab[t_b], t_b/n_T + cond_b]
    x_ref    : VMEM (B*C, HW)  free NCHW reshape, channel-contiguous rows
    eps_ref  : VMEM (B*C, HW)
    w_ref    : VMEM (C, C)     synthetic 1x1-conv (channel-mix) weight
    bias_ref : VMEM (C, 1)     synthetic bias
    out_ref  : SMEM (1, 1)     final MSE loss (scalar)
    """
    HW = x_ref.shape[1]
    w = w_ref[...]        # (C, C)
    bias = bias_ref[...]  # (C, 1)

    total = jnp.float32(0.0)
    for b in range(B):  # static unroll (B is tiny)
        sa = scal_ref[0, b]   # sqrtab[t_b]
        sm = scal_ref[1, b]   # sqrtmab[t_b]
        add = scal_ref[2, b]  # t_b/n_T + class-cond_b

        xb = x_ref[b * C:(b + 1) * C, :]     # (C, HW)
        eb = eps_ref[b * C:(b + 1) * C, :]   # (C, HW)

        # forward diffusion: x_t = sqrtab[t] * x + sqrtmab[t] * eps  (pure VPU)
        x_t = sa * xb + sm * eb

        # synthetic eps-predictor: channel mix as unrolled VPU outer-product
        # accumulate (no MXU push/drain for a degenerate 4x4 contraction).
        h = w[:, 0:1] * x_t[0:1, :]
        for cc in range(1, C):
            h = h + w[:, cc:cc + 1] * x_t[cc:cc + 1, :]

        # bias (per-channel) + timestep/context conditioning (per-batch scalar)
        eps_pred = h + (bias + add)

        d = eb - eps_pred
        total = total + jnp.sum(d * d)

    # nn.MSELoss() default reduction = mean over all elements; finish in-kernel.
    out_ref[0, 0] = total * (1.0 / (B * C * HW))


def build_ddpm_loss_call(B, C, HW):
    kernel = functools.partial(ddpm_loss_kernel, B=B, C=C)
    vmem = lambda: pl.BlockSpec(memory_space=pltpu.MemorySpace.VMEM)
    smem = lambda: pl.BlockSpec(memory_space=pltpu.MemorySpace.SMEM)
    return pl.pallas_call(
        kernel,
        out_shape=jax.ShapeDtypeStruct((1, 1), jnp.float32),
        in_specs=[smem(), vmem(), vmem(), vmem(), vmem()],
        out_specs=smem(),
    )


# --------------------------------------------------------------------------
# DDPM.forward equivalent (training loss)
# --------------------------------------------------------------------------
def _draw_training_noise(key, x, c, n_T, drop_prob):
    k_t, k_eps, k_mask = jax.random.split(key, 3)
    # t ~ randint(1, n_T + 1, (B,))
    t = jax.random.randint(k_t, (x.shape[0],), 1, n_T + 1)
    # eps ~ randn_like(x)
    eps = jax.random.normal(k_eps, x.shape, dtype=jnp.float32)
    # context_mask ~ Bernoulli(drop_prob), same shape as c
    context_mask = jax.random.bernoulli(k_mask, p=drop_prob,
                                        shape=c.shape).astype(jnp.float32)
    return t, eps, context_mask


def ddpm_forward(key, x, c, params, sqrtab, sqrtmab, n_T, drop_prob):
    B, C, H, W = x.shape
    HW = H * W

    t, eps, context_mask = _draw_training_noise(key, x, c, n_T, drop_prob)

    # per-batch scalars -> one tiny (3, B) SMEM array (no jnp.repeat rows)
    sqrtab_t = sqrtab[t]                                    # (B,)
    sqrtmab_t = sqrtmab[t]                                  # (B,)
    t_norm = t.astype(jnp.float32) / n_T                    # (B,)
    cond = params["class_emb"][c] * (1.0 - context_mask)    # (B,)
    scal = jnp.stack([sqrtab_t, sqrtmab_t, t_norm + cond], axis=0)  # (3, B)

    # transpose-free, full-sublane slabs: NCHW -> (B*C, HW)
    x_rc = x.reshape(B * C, HW)
    eps_rc = eps.reshape(B * C, HW)

    call = build_ddpm_loss_call(B, C, HW)
    out = call(scal, x_rc, eps_rc, params["w"], params["bias"])  # (1, 1)
    return out[0, 0]


# pure-JAX reference (same random draws, NCHW layout) for correctness check
def ddpm_forward_ref(key, x, c, params, sqrtab, sqrtmab, n_T, drop_prob):
    B, C, H, W = x.shape
    t, eps, context_mask = _draw_training_noise(key, x, c, n_T, drop_prob)
    x_t = (sqrtab[t][:, None, None, None] * x
           + sqrtmab[t][:, None, None, None] * eps)
    t_norm = t.astype(jnp.float32) / n_T
    cond = params["class_emb"][c] * (1.0 - context_mask)
    h = jnp.einsum("oc,bchw->bohw", params["w"], x_t)
    eps_pred = (h + params["bias"].reshape(1, C, 1, 1)
                + t_norm[:, None, None, None] + cond[:, None, None, None])
    return jnp.mean((eps - eps_pred) ** 2)


# --------------------------------------------------------------------------
# main
# --------------------------------------------------------------------------
if __name__ == "__main__":
    B, C, H, W = 2, 4, 16, 16
    n_T = 400
    betas = (1e-4, 0.02)
    drop_prob = 0.1
    n_classes = 10

    sched = ddpm_schedules(betas[0], betas[1], n_T)
    sqrtab = sched["sqrtab"]
    sqrtmab = sched["sqrtmab"]

    key = jax.random.PRNGKey(0)
    k_x, k_c, k_w, k_b, k_emb, k_fwd = jax.random.split(key, 6)

    # deterministic example inputs
    x = jax.random.normal(k_x, (B, C, H, W), dtype=jnp.float32)
    c = jax.random.randint(k_c, (B,), 0, n_classes)

    # deterministic synthetic nn_model parameters
    params = {
        "w": 0.1 * jax.random.normal(k_w, (C, C), dtype=jnp.float32),
        "bias": 0.01 * jax.random.normal(k_b, (C, 1), dtype=jnp.float32),
        "class_emb": 0.1 * jax.random.normal(k_emb, (n_classes,), dtype=jnp.float32),
    }

    fwd = jax.jit(
        functools.partial(ddpm_forward, n_T=n_T, drop_prob=drop_prob)
    )
    loss = jax.block_until_ready(fwd(k_fwd, x, c, params, sqrtab, sqrtmab))

    ref = ddpm_forward_ref(k_fwd, x, c, params, sqrtab, sqrtmab, n_T, drop_prob)

    assert loss.shape == () and jnp.isfinite(loss)
    assert jnp.allclose(loss, ref, rtol=1e-3, atol=1e-3)
    print("KERNEL_OK")
</pallas_src>

<mosaic_0001>
module attributes {stable_mosaic.version = 11 : i64} {
  func.func @ddpm_loss_kernel(%arg0: memref<3x2xf32, #tpu.memory_space<smem>>, %arg1: memref<8x256xf32, #tpu.memory_space<vmem>>, %arg2: memref<8x256xf32, #tpu.memory_space<vmem>>, %arg3: memref<4x4xf32, #tpu.memory_space<vmem>>, %arg4: memref<4x1xf32, #tpu.memory_space<vmem>>, %arg5: memref<1x1xf32, #tpu.memory_space<smem>>) attributes {dimension_semantics = [], scalar_prefetch = 0 : i64, scratch_operands = 0 : i64, tpu.core_type = #tpu.core_type<tc>} {
    %c0 = arith.constant 0 : index
    %c0_0 = arith.constant 0 : index
    %0 = vector.load %arg3[%c0, %c0_0] : memref<4x4xf32, #tpu.memory_space<vmem>>, vector<4x4xf32>
    %c0_1 = arith.constant 0 : index
    %c0_2 = arith.constant 0 : index
    %1 = vector.load %arg4[%c0_1, %c0_2] : memref<4x1xf32, #tpu.memory_space<vmem>>, vector<4x1xf32>
    %c0_3 = arith.constant 0 : index
    %c0_4 = arith.constant 0 : index
    %2 = memref.load %arg0[%c0_3, %c0_4] : memref<3x2xf32, #tpu.memory_space<smem>>
    %c1 = arith.constant 1 : index
    %c0_5 = arith.constant 0 : index
    %3 = memref.load %arg0[%c1, %c0_5] : memref<3x2xf32, #tpu.memory_space<smem>>
    %c2 = arith.constant 2 : index
    %c0_6 = arith.constant 0 : index
    %4 = memref.load %arg0[%c2, %c0_6] : memref<3x2xf32, #tpu.memory_space<smem>>
    %c0_7 = arith.constant 0 : index
    %c0_8 = arith.constant 0 : index
    %5 = vector.load %arg1[%c0_7, %c0_8] : memref<8x256xf32, #tpu.memory_space<vmem>>, vector<4x256xf32>
    %c0_9 = arith.constant 0 : index
    %c0_10 = arith.constant 0 : index
    %6 = vector.load %arg2[%c0_9, %c0_10] : memref<8x256xf32, #tpu.memory_space<vmem>>, vector<4x256xf32>
    %7 = vector.broadcast %2 : f32 to vector<4x256xf32>
    %8 = arith.mulf %7, %5 : vector<4x256xf32>
    %9 = vector.broadcast %3 : f32 to vector<4x256xf32>
    %10 = arith.mulf %9, %6 : vector<4x256xf32>
    %11 = arith.addf %8, %10 : vector<4x256xf32>
    %12 = vector.extract_strided_slice %0 {offsets = [0, 0], sizes = [4, 1], strides = [1, 1]} : vector<4x4xf32> to vector<4x1xf32>
    %13 = vector.extract_strided_slice %11 {offsets = [0, 0], sizes = [1, 256], strides = [1, 1]} : vector<4x256xf32> to vector<1x256xf32>
    %14 = vector.broadcast %12 : vector<4x1xf32> to vector<4x256xf32>
    %15 = vector.broadcast %13 : vector<1x256xf32> to vector<4x256xf32>
    %16 = arith.mulf %14, %15 : vector<4x256xf32>
    %17 = vector.extract_strided_slice %0 {offsets = [0, 1], sizes = [4, 1], strides = [1, 1]} : vector<4x4xf32> to vector<4x1xf32>
    %18 = vector.extract_strided_slice %11 {offsets = [1, 0], sizes = [1, 256], strides = [1, 1]} : vector<4x256xf32> to vector<1x256xf32>
    %19 = vector.broadcast %17 : vector<4x1xf32> to vector<4x256xf32>
    %20 = vector.broadcast %18 : vector<1x256xf32> to vector<4x256xf32>
    %21 = arith.mulf %19, %20 : vector<4x256xf32>
    %22 = arith.addf %16, %21 : vector<4x256xf32>
    %23 = vector.extract_strided_slice %0 {offsets = [0, 2], sizes = [4, 1], strides = [1, 1]} : vector<4x4xf32> to vector<4x1xf32>
    %24 = vector.extract_strided_slice %11 {offsets = [2, 0], sizes = [1, 256], strides = [1, 1]} : vector<4x256xf32> to vector<1x256xf32>
    %25 = vector.broadcast %23 : vector<4x1xf32> to vector<4x256xf32>
    %26 = vector.broadcast %24 : vector<1x256xf32> to vector<4x256xf32>
    %27 = arith.mulf %25, %26 : vector<4x256xf32>
    %28 = arith.addf %22, %27 : vector<4x256xf32>
    %29 = vector.extract_strided_slice %0 {offsets = [0, 3], sizes = [4, 1], strides = [1, 1]} : vector<4x4xf32> to vector<4x1xf32>
    %30 = vector.extract_strided_slice %11 {offsets = [3, 0], sizes = [1, 256], strides = [1, 1]} : vector<4x256xf32> to vector<1x256xf32>
    %31 = vector.broadcast %29 : vector<4x1xf32> to vector<4x256xf32>
    %32 = vector.broadcast %30 : vector<1x256xf32> to vector<4x256xf32>
    %33 = arith.mulf %31, %32 : vector<4x256xf32>
    %34 = arith.addf %28, %33 : vector<4x256xf32>
    %35 = vector.broadcast %4 : f32 to vector<4x1xf32>
    %36 = arith.addf %1, %35 : vector<4x1xf32>
    %37 = vector.broadcast %36 : vector<4x1xf32> to vector<4x256xf32>
    %38 = arith.addf %34, %37 : vector<4x256xf32>
    %39 = arith.subf %6, %38 : vector<4x256xf32>
    %40 = arith.mulf %39, %39 : vector<4x256xf32>
    %41 = vector.shape_cast %40 : vector<4x256xf32> to vector<1x4x256xf32>
    %cst = arith.constant dense<0.000000e+00> : vector<1xf32>
    %42 = vector.multi_reduction <add>, %41, %cst [1, 2] : vector<1x4x256xf32> to vector<1xf32>
    %43 = vector.shape_cast %42 : vector<1xf32> to vector<1x1x1xf32>
    %44 = vector.extract %43[0, 0, 0] : f32 from vector<1x1x1xf32>
    %cst_11 = arith.constant 0.000000e+00 : f32
    %45 = arith.addf %cst_11, %44 : f32
    %c0_12 = arith.constant 0 : index
    %c1_13 = arith.constant 1 : index
    %46 = memref.load %arg0[%c0_12, %c1_13] : memref<3x2xf32, #tpu.memory_space<smem>>
    %c1_14 = arith.constant 1 : index
    %c1_15 = arith.constant 1 : index
    %47 = memref.load %arg0[%c1_14, %c1_15] : memref<3x2xf32, #tpu.memory_space<smem>>
    %c2_16 = arith.constant 2 : index
    %c1_17 = arith.constant 1 : index
    %48 = memref.load %arg0[%c2_16, %c1_17] : memref<3x2xf32, #tpu.memory_space<smem>>
    %c4 = arith.constant 4 : index
    %c0_18 = arith.constant 0 : index
    %49 = vector.load %arg1[%c4, %c0_18] : memref<8x256xf32, #tpu.memory_space<vmem>>, vector<4x256xf32>
    %c4_19 = arith.constant 4 : index
    %c0_20 = arith.constant 0 : index
    %50 = vector.load %arg2[%c4_19, %c0_20] : memref<8x256xf32, #tpu.memory_space<vmem>>, vector<4x256xf32>
    %51 = vector.broadcast %46 : f32 to vector<4x256xf32>
    %52 = arith.mulf %51, %49 : vector<4x256xf32>
    %53 = vector.broadcast %47 : f32 to vector<4x256xf32>
    %54 = arith.mulf %53, %50 : vector<4x256xf32>
    %55 = arith.addf %52, %54 : vector<4x256xf32>
    %56 = vector.extract_strided_slice %0 {offsets = [0, 0], sizes = [4, 1], strides = [1, 1]} : vector<4x4xf32> to vector<4x1xf32>
    %57 = vector.extract_strided_slice %55 {offsets = [0, 0], sizes = [1, 256], strides = [1, 1]} : vector<4x256xf32> to vector<1x256xf32>
    %58 = vector.broadcast %56 : vector<4x1xf32> to vector<4x256xf32>
    %59 = vector.broadcast %57 : vector<1x256xf32> to vector<4x256xf32>
    %60 = arith.mulf %58, %59 : vector<4x256xf32>
    %61 = vector.extract_strided_slice %0 {offsets = [0, 1], sizes = [4, 1], strides = [1, 1]} : vector<4x4xf32> to vector<4x1xf32>
    %62 = vector.extract_strided_slice %55 {offsets = [1, 0], sizes = [1, 256], strides = [1, 1]} : vector<4x256xf32> to vector<1x256xf32>
    %63 = vector.broadcast %61 : vector<4x1xf32> to vector<4x256xf32>
    %64 = vector.broadcast %62 : vector<1x256xf32> to vector<4x256xf32>
    %65 = arith.mulf %63, %64 : vector<4x256xf32>
    %66 = arith.addf %60, %65 : vector<4x256xf32>
    %67 = vector.extract_strided_slice %0 {offsets = [0, 2], sizes = [4, 1], strides = [1, 1]} : vector<4x4xf32> to vector<4x1xf32>
    %68 = vector.extract_strided_slice %55 {offsets = [2, 0], sizes = [1, 256], strides = [1, 1]} : vector<4x256xf32> to vector<1x256xf32>
    %69 = vector.broadcast %67 : vector<4x1xf32> to vector<4x256xf32>
    %70 = vector.broadcast %68 : vector<1x256xf32> to vector<4x256xf32>
    %71 = arith.mulf %69, %70 : vector<4x256xf32>
    %72 = arith.addf %66, %71 : vector<4x256xf32>
    %73 = vector.extract_strided_slice %0 {offsets = [0, 3], sizes = [4, 1], strides = [1, 1]} : vector<4x4xf32> to vector<4x1xf32>
    %74 = vector.extract_strided_slice %55 {offsets = [3, 0], sizes = [1, 256], strides = [1, 1]} : vector<4x256xf32> to vector<1x256xf32>
    %75 = vector.broadcast %73 : vector<4x1xf32> to vector<4x256xf32>
    %76 = vector.broadcast %74 : vector<1x256xf32> to vector<4x256xf32>
    %77 = arith.mulf %75, %76 : vector<4x256xf32>
    %78 = arith.addf %72, %77 : vector<4x256xf32>
    %79 = vector.broadcast %48 : f32 to vector<4x1xf32>
    %80 = arith.addf %1, %79 : vector<4x1xf32>
    %81 = vector.broadcast %80 : vector<4x1xf32> to vector<4x256xf32>
    %82 = arith.addf %78, %81 : vector<4x256xf32>
    %83 = arith.subf %50, %82 : vector<4x256xf32>
    %84 = arith.mulf %83, %83 : vector<4x256xf32>
    %85 = vector.shape_cast %84 : vector<4x256xf32> to vector<1x4x256xf32>
    %cst_21 = arith.constant dense<0.000000e+00> : vector<1xf32>
    %86 = vector.multi_reduction <add>, %85, %cst_21 [1, 2] : vector<1x4x256xf32> to vector<1xf32>
    %87 = vector.shape_cast %86 : vector<1xf32> to vector<1x1x1xf32>
    %88 = vector.extract %87[0, 0, 0] : f32 from vector<1x1x1xf32>
    %89 = arith.addf %45, %88 : f32
    %cst_22 = arith.constant 4.8828125E-4 : f32
    %90 = arith.mulf %89, %cst_22 : f32
    %c0_23 = arith.constant 0 : index
    %c0_24 = arith.constant 0 : index
    %91 = memref.load %arg5[%c0_23, %c0_24] : memref<1x1xf32, #tpu.memory_space<smem>>
    memref.store %90, %arg5[%c0_23, %c0_24] : memref<1x1xf32, #tpu.memory_space<smem>>
    return
  }
}

</mosaic_0001>

<llo_original>
// kernel: ddpm_forward.1
$region0: #{ddpm_forward.1}
  #allocation0 [shape = 'u32[]', space=smem, size = 0x4, offset = 0x4, fixed_abs, tag = 'smem constant byte address 0x4 - core index']
  #allocation1 [shape = 'u32[144,128]{1,0:T(1,128)}', space=vmem, size = 0x12000, scoped, tag = 'internal scratch']
  %s0 = inlined_call_operand.vmem [shape: f32[3,2], index: 0, kind: input, shape index: {}]
  %s1 = inlined_call_operand.vmem [shape: f32[8,256], index: 1, kind: input, shape index: {}]
  %s2 = inlined_call_operand.vmem [shape: f32[8,256], index: 2, kind: input, shape index: {}]
  %s3 = inlined_call_operand.vmem [shape: f32[4,4], index: 3, kind: input, shape index: {}]
  %s4 = inlined_call_operand.vmem [shape: f32[4,1], index: 4, kind: input, shape index: {}]
  %s5 = inlined_call_operand.hbm [shape: f32[1,1], index: 5, kind: output, shape index: {}]
  %s6 = sld [smem:[#allocation0]]
  $region34: #{ddpm_forward.1} parent=0
    _
  %s8 = ssub.s32 1, %s6
  %s9 = scalar_select 0, %s8, %s6
  $region1: #{ddpm_forward.1} parent=0
    #allocation2 [shape = 'u8[2048]{0}', space=smem, size = 0x800, scoped, tag = 'input window, operand 0, single buffered']
    #allocation3 [shape = 's32[1]{0}', space=sflag, size = 0x4, scoped, tag = 'scoped memory for ddpm_forward.1']
    #allocation4 [shape = 's32[1]{0}', space=sflag, size = 0x4, scoped, tag = 'scoped memory for ddpm_forward.1']
    #allocation5 [shape = 'u8[512]{0}', space=smem, size = 0x200, scoped, tag = 'output window, operand 0, single buffered']
    %10 = vsyncpa [#allocation4], 0
    %11 = vsyncpa [#allocation3], 0
    // Predicated region
    $region2: #{ddpm_forward.1} parent=1 // pred_check
      _
    $region3: #{ddpm_forward.1} parent=1 // pred_check_branch
      %13 = sbr.rel (0) target = $region5
    $region4: #{ddpm_forward.1} parent=1 // pred_region
      %s15 = ssub.s32 64, 64
      %16 = vsyncadd [#allocation4], %s15
      %s18 = sshll.u32 %s0, 4
      %s19 = int_to_ptr.vmem [resolvable:$true] %s18
      %21 = dma.vmem_to_smem %s19, 64, [#allocation2], [#allocation4]
    $region5: #{ddpm_forward.1} parent=1 // pred_fallthru
      _
    // Predicated region
    $region6: #{ddpm_forward.1} parent=1 // pred_check
      _
    $region7: #{ddpm_forward.1} parent=1 // pred_check_branch
      %23 = sbr.rel (0) target = $region9
    $region8: #{ddpm_forward.1} parent=1 // pred_region
      _
    $region9: #{ddpm_forward.1} parent=1 // pred_fallthru
      _
    // Predicated region
    $region10: #{ddpm_forward.1} parent=1 // pred_check
      _
    $region11: #{ddpm_forward.1} parent=1 // pred_check_branch
      %25 = sbr.rel (0) target = $region13
    $region12: #{ddpm_forward.1} parent=1 // pred_region
      _
    $region13: #{ddpm_forward.1} parent=1 // pred_fallthru
      _
    // Predicated region
    $region14: #{ddpm_forward.1} parent=1 // pred_check
      _
    $region15: #{ddpm_forward.1} parent=1 // pred_check_branch
      %27 = sbr.rel (0) target = $region17
    $region16: #{ddpm_forward.1} parent=1 // pred_region
      _
    $region17: #{ddpm_forward.1} parent=1 // pred_fallthru
      _
    // Predicated region
    $region18: #{ddpm_forward.1} parent=1 // pred_check
      _
    $region19: #{ddpm_forward.1} parent=1 // pred_check_branch
      %29 = sbr.rel (0) target = $region21
    $region20: #{ddpm_forward.1} parent=1 // pred_region
      _
    $region21: #{ddpm_forward.1} parent=1 // pred_fallthru
      _
    // Predicated region
    $region22: #{ddpm_forward.1} parent=1 // pred_check
      _
    $region23: #{ddpm_forward.1} parent=1 // pred_check_branch
      %31 = sbr.rel (0) target = $region25
    $region24: #{ddpm_forward.1} parent=1 // pred_region
      %32 = dma.done [#allocation4], 64
    $region25: #{ddpm_forward.1} parent=1 // pred_fallthru
      _
    %33 = sfence
    %v34 = vld [vmem:[%s3] sm:$0xf]
    %v35 = vld [vmem:[%s4] sm:$0xf]
    %s36 = sld [smem:[#allocation2]]
    %s37 = sld [smem:[#allocation2 + $0x80]]
    %s38 = sld [smem:[#allocation2 + $0x100]]
    %v39 = vld [vmem:[%s1] sm:$0xf]
    %v40 = vld [vmem:[%s1 + $0x8] sm:$0xf]
    %v41 = vld [vmem:[%s2] sm:$0xf]
    %v42 = vld [vmem:[%s2 + $0x8] sm:$0xf]
    %v43 = vstv %s36
    %v44 = vmul.f32 %v43, %v39
    %v45 = vmul.f32 %v43, %v40
    %v46 = vstv %s37
    %v47 = vmul.f32 %v46, %v41
    %v48 = vmul.f32 %v46, %v42
    %v49 = vadd.f32 %v44, %v47
    %v50 = vadd.f32 %v45, %v48
    %52 = vset.pattern.permute.xlu0 0
    %53 = vperm.xlu0 %52, %v34
    %v54 = vpop.permute.xlu0 %53
    %v56 = vlaneseq
    %v57 = vshrl.u32 %v56, 7
    %v58 = vsub.s32 0, %v57
    %v59 = vrot.slane %v49, %v58
    %v60 = vlaneseq
    %v61 = vshrl.u32 %v60, 7
    %v62 = vsub.s32 0, %v61
    %v63 = vrot.slane %v50, %v62
    %v64 = vmul.f32 %v54, %v59
    %v65 = vmul.f32 %v54, %v63
    %66 = vset.pattern.permute.xlu0 1
    %67 = vperm.xlu0 %66, %v34
    %v68 = vpop.permute.xlu0 %67
    %v70 = vlaneseq
    %v71 = vshrl.u32 %v70, 7
    %v72 = vsub.s32 1, %v71
    %v73 = vrot.slane %v49, %v72
    %v74 = vlaneseq
    %v75 = vshrl.u32 %v74, 7
    %v76 = vsub.s32 1, %v75
    %v77 = vrot.slane %v50, %v76
    %v78 = vmul.f32 %v68, %v73
    %v79 = vmul.f32 %v68, %v77
    %v80 = vadd.f32 %v64, %v78
    %v81 = vadd.f32 %v65, %v79
    %82 = vset.pattern.permute.xlu0 2
    %83 = vperm.xlu0 %82, %v34
    %v84 = vpop.permute.xlu0 %83
    %v86 = vlaneseq
    %v87 = vshrl.u32 %v86, 7
    %v88 = vsub.s32 2, %v87
    %v89 = vrot.slane %v49, %v88
    %v90 = vlaneseq
    %v91 = vshrl.u32 %v90, 7
    %v92 = vsub.s32 2, %v91
    %v93 = vrot.slane %v50, %v92
    %v94 = vmul.f32 %v84, %v89
    %v95 = vmul.f32 %v84, %v93
    %v96 = vadd.f32 %v80, %v94
    %v97 = vadd.f32 %v81, %v95
    %98 = vset.pattern.permute.xlu0 3
    %99 = vperm.xlu0 %98, %v34
    %v100 = vpop.permute.xlu0 %99
    %v102 = vlaneseq
    %v103 = vshrl.u32 %v102, 7
    %v104 = vsub.s32 3, %v103
    %v105 = vrot.slane %v49, %v104
    %v106 = vlaneseq
    %v107 = vshrl.u32 %v106, 7
    %v108 = vsub.s32 3, %v107
    %v109 = vrot.slane %v50, %v108
    %v110 = vmul.f32 %v100, %v105
    %v111 = vmul.f32 %v100, %v109
    %v112 = vadd.f32 %v96, %v110
    %v113 = vadd.f32 %v97, %v111
    %v114 = vstv %s38
    %v115 = vadd.f32 %v35, %v114
    %117 = vset.pattern.permute.xlu0 0
    %118 = vperm.xlu0 %117, %v115
    %v119 = vpop.permute.xlu0 %118
    %v121 = vadd.f32 %v112, %v119
    %v122 = vadd.f32 %v113, %v119
    %v123 = vsub.f32 %v41, %v121
    %v124 = vsub.f32 %v42, %v122
    %v125 = vmul.f32 %v123, %v123
    %v126 = vmul.f32 %v124, %v124
    %vm127 = vcmask 1043456
    %v128 = vsel %vm127, %v125, 0.0
    %v129 = vsel %vm127, %v126, 0.0
    %v130 = vadd.f32 %v128, %v129
    %131 = vadd.xlane.f32.xlu0 %v130
    %v132 = vpop.xlane.xlu0 %131
    %v133 = vrot.slane %v132, 4
    %v134 = vadd.f32 %v132, %v133
    %v135 = vrot.slane %v134, 2
    %v136 = vadd.f32 %v134, %v135
    %v137 = vrot.slane %v136, 1
    %v138 = vadd.f32 %v136, %v137
    %s139 = vtos %v138
    %s140 = sadd.f32 %s139, 0.0
    %s141 = sld [smem:[#allocation2 + $0x1]]
    %s142 = sld [smem:[#allocation2 + $0x81]]
    %s143 = sld [smem:[#allocation2 + $0x101]]
    %v144 = vld [vmem:[%s1] sm:$0xf0]
    %v145 = vld [vmem:[%s1 + $0x8] sm:$0xf0]
    %v146 = vld [vmem:[%s2] sm:$0xf0]
    %v147 = vld [vmem:[%s2 + $0x8] sm:$0xf0]
    %v148 = vstv %s141
    %v149 = vmul.f32 %v148, %v144
    %v150 = vmul.f32 %v148, %v145
    %v151 = vstv %s142
    %v152 = vmul.f32 %v151, %v146
    %v153 = vmul.f32 %v151, %v147
    %v154 = vadd.f32 %v149, %v152
    %v155 = vadd.f32 %v150, %v153
    %v156 = vlaneseq
    %v157 = vshrl.u32 %v156, 7
    %v158 = vsub.s32 4, %v157
    %v159 = vrot.slane %v154, %v158
    %v160 = vlaneseq
    %v161 = vshrl.u32 %v160, 7
    %v162 = vsub.s32 4, %v161
    %v163 = vrot.slane %v155, %v162
    %v164 = vmul.f32 %v54, %v159
    %v165 = vmul.f32 %v54, %v163
    %v166 = vlaneseq
    %v167 = vshrl.u32 %v166, 7
    %v168 = vsub.s32 5, %v167
    %v169 = vrot.slane %v154, %v168
    %v170 = vlaneseq
    %v171 = vshrl.u32 %v170, 7
    %v172 = vsub.s32 5, %v171
    %v173 = vrot.slane %v155, %v172
    %v174 = vmul.f32 %v68, %v169
    %v175 = vmul.f32 %v68, %v173
    %v176 = vadd.f32 %v164, %v174
    %v177 = vadd.f32 %v165, %v175
    %v178 = vlaneseq
    %v179 = vshrl.u32 %v178, 7
    %v180 = vsub.s32 6, %v179
    %v181 = vrot.slane %v154, %v180
    %v182 = vlaneseq
    %v183 = vshrl.u32 %v182, 7
    %v184 = vsub.s32 6, %v183
    %v185 = vrot.slane %v155, %v184
    %v186 = vmul.f32 %v84, %v181
    %v187 = vmul.f32 %v84, %v185
    %v188 = vadd.f32 %v176, %v186
    %v189 = vadd.f32 %v177, %v187
    %v190 = vlaneseq
    %v191 = vshrl.u32 %v190, 7
    %v192 = vsub.s32 7, %v191
    %v193 = vrot.slane %v154, %v192
    %v194 = vlaneseq
    %v195 = vshrl.u32 %v194, 7
    %v196 = vsub.s32 7, %v195
    %v197 = vrot.slane %v155, %v196
    %v198 = vmul.f32 %v100, %v193
    %v199 = vmul.f32 %v100, %v197
    %v200 = vadd.f32 %v188, %v198
    %v201 = vadd.f32 %v189, %v199
    %v202 = vstv %s143
    %v203 = vadd.f32 %v35, %v202
    %205 = vset.pattern.permute.xlu0 0
    %206 = vperm.xlu0 %205, %v203
    %v207 = vpop.permute.xlu0 %206
    %v209 = vadd.f32 %v200, %v207
    %v210 = vadd.f32 %v201, %v207
    %v213 = vrot.slane %v209, 4
    %v214 = vrot.slane %v210, 4
    %v217 = vsub.f32 %v146, %v213
    %v218 = vsub.f32 %v147, %v214
    %v219 = vmul.f32 %v217, %v217
    %v220 = vmul.f32 %v218, %v218
    %v223 = vrot.slane %v219, 4
    %v224 = vrot.slane %v220, 4
    %v227 = vsel %vm127, %v223, 0.0
    %v228 = vsel %vm127, %v224, 0.0
    %v229 = vadd.f32 %v227, %v228
    %230 = vadd.xlane.f32.xlu0 %v229
    %v231 = vpop.xlane.xlu0 %230
    %v232 = vrot.slane %v231, 4
    %v233 = vadd.f32 %v231, %v232
    %v234 = vrot.slane %v233, 2
    %v235 = vadd.f32 %v233, %v234
    %v236 = vrot.slane %v235, 1
    %v237 = vadd.f32 %v235, %v236
    %s238 = vtos %v237
    %s239 = sadd.f32 %s140, %s238
    %s240 = smul.f32 %s239, 0.00048828125
    %s241 = scalar_lea.smem [#allocation5], 0
    %242 = sst [smem:[%s241]] %s240
    // Predicated region
    $region26: #{ddpm_forward.1} parent=1 // pred_check
      _
    $region27: #{ddpm_forward.1} parent=1 // pred_check_branch
      %244 = sbr.rel (0) target = $region29
    $region28: #{ddpm_forward.1} parent=1 // pred_region
      %s246 = ssub.s32 16, 16
      %247 = vsyncadd [#allocation3], %s246
      %250 = dma.smem_to_hbm [#allocation5], 16, %s5, [#allocation3]
    $region29: #{ddpm_forward.1} parent=1 // pred_fallthru
      _
    // Predicated region
    $region30: #{ddpm_forward.1} parent=1 // pred_check
      _
    $region31: #{ddpm_forward.1} parent=1 // pred_check_branch
      %252 = sbr.rel (0) target = $region33
    $region32: #{ddpm_forward.1} parent=1 // pred_region
      %253 = dma.done [#allocation3], 16
    $region33: #{ddpm_forward.1} parent=1 // pred_fallthru
      _
    %254 = sfence
    %255 = vsyncpa [#allocation3], 1
    %256 = vsyncpa [#allocation4], 1

</llo_original>
